<compile_context>
chip_gen: v5e
topology: v5e:2x2
jax: 0.10.0
libtpu: 0.0.40
codegen_flags: <defaults>
</compile_context>

<pallas_src>
import functools

import jax
import jax.numpy as jnp
from jax import lax
from jax.experimental import pallas as pl
from jax.experimental.pallas import tpu as pltpu


# Per in/out block f32-equivalent byte budget.  With double-buffered in+out
# blocks plus ~3 f32 temporaries live in-kernel this keeps total VMEM well
# under 32 MiB on all generations (v5e/v6e 128 MiB, v7x 64 MiB physical).
_TARGET_F32_BLOCK_BYTES = 2 * 1024 * 1024


# --------------------------------- kernel -----------------------------------
def _gdn_kernel(x_ref, gamma_ref, beta_ref, o_ref, *, inverse, bf16_matmul):
    # x_ref:     (1, C, T)  input slab in its native dtype, lane-dense spatial
    # gamma_ref: (C, C)     reparameterised gamma (out_ch, in_ch), f32
    # beta_ref:  (C, 1)     reparameterised beta, f32
    x = x_ref[0].astype(jnp.float32)                    # upcast in-kernel
    x2 = x * x

    if bf16_matmul:
        # Only for very large C (MXU-limited regime); f32 accumulation kept.
        norm = jnp.dot(gamma_ref[...].astype(jnp.bfloat16),
                       x2.astype(jnp.bfloat16),
                       preferred_element_type=jnp.float32)
    else:
        norm = jnp.dot(gamma_ref[...], x2,
                       preferred_element_type=jnp.float32)   # single MXU matmul
    norm = norm + beta_ref[...]                         # bias fused in epilogue

    if inverse:
        o_ref[0] = (x * jnp.sqrt(norm)).astype(o_ref.dtype)
    else:
        # rsqrt goes to the EUP slot; multiply instead of divide on the VPU.
        o_ref[0] = (x * lax.rsqrt(norm)).astype(o_ref.dtype)


# -------------------------------- tiling -------------------------------------
def _pick_tile(hw_pad, C, B):
    """Largest 128-multiple divisor of hw_pad within a C-aware byte budget."""
    target = max(128, (_TARGET_F32_BLOCK_BYTES // (4 * C)) // 128 * 128)
    t = min(hw_pad, target)
    t = max(128, (t // 128) * 128)
    while hw_pad % t != 0:          # hw_pad is a multiple of 128 -> terminates
        t -= 128
    # Keep >= 2 grid blocks on a parallel axis so both v7x TensorCores work.
    if B == 1 and hw_pad // t < 2 and hw_pad >= 256:
        t2 = ((hw_pad // 2) // 128) * 128
        while t2 >= 128 and hw_pad % t2 != 0:
            t2 -= 128
        if t2 >= 128:
            t = t2
    return t


# -------------------------------- wrapper ------------------------------------
def gdn_forward(x, beta_param, gamma_param, *, inverse=False,
                beta_min=1e-6, reparam_offset=2.0 ** (-18)):
    """GDN.forward.

    x:           (B, C, H, W) or (B, C, D, W, H)  (PyTorch NCHW / 5-D layout)
    beta_param:  (C,)     raw nn.Parameter beta
    gamma_param: (C, C)   raw nn.Parameter gamma
    returns: same shape and dtype as x.
    """
    orig_shape = x.shape
    orig_dtype = x.dtype
    if x.ndim == 5:                      # "unfold" path of the reference module
        b, c, d, w, h = x.shape
        x = x.reshape(b, c, d * w, h)
    B, C, H, W = x.shape
    HW = H * W

    # ---- parameter re-parameterisation (LowerBound -> square -> -pedestal) --
    pedestal = reparam_offset ** 2
    beta_bound = (beta_min + pedestal) ** 0.5
    gamma_bound = reparam_offset
    beta = jnp.maximum(beta_param.astype(jnp.float32), beta_bound) ** 2 - pedestal
    gamma = jnp.maximum(gamma_param.astype(jnp.float32), gamma_bound) ** 2 - pedestal

    # NCHW-native flatten, NATIVE dtype (no f32 cast passes over HBM).
    x_flat = x.reshape(B, C, HW)
    hw_pad = ((HW + 127) // 128) * 128
    if hw_pad != HW:
        # Zero padding is safe: norm = sqrt(beta) > 0 on padded columns.
        x_flat = jnp.pad(x_flat, ((0, 0), (0, 0), (0, hw_pad - HW)))

    gamma_m = gamma.reshape(C, C)
    beta_col = beta.reshape(C, 1)

    T = _pick_tile(hw_pad, C, B)
    grid = (B, hw_pad // T)

    kernel = functools.partial(_gdn_kernel, inverse=inverse,
                               bf16_matmul=(C >= 512))

    out = pl.pallas_call(
        kernel,
        out_shape=jax.ShapeDtypeStruct((B, C, hw_pad), orig_dtype),
        grid_spec=pltpu.PrefetchScalarGridSpec(
            num_scalar_prefetch=0,
            grid=grid,
            in_specs=[
                pl.BlockSpec((1, C, T), lambda b, t: (b, 0, t)),
                pl.BlockSpec((C, C), lambda b, t: (0, 0)),
                pl.BlockSpec((C, 1), lambda b, t: (0, 0)),
            ],
            out_specs=pl.BlockSpec((1, C, T), lambda b, t: (b, 0, t)),
        ),
        compiler_params=pltpu.CompilerParams(
            dimension_semantics=("parallel", "parallel"),
            vmem_limit_bytes=32 * 1024 * 1024),
    )(x_flat, gamma_m, beta_col)

    if hw_pad != HW:
        out = out[:, :, :HW]
    return out.reshape(orig_shape)


# ------------------------- pure-JAX reference (for checking) -----------------
def _ref_gdn(x, beta_param, gamma_param, *, inverse=False,
             beta_min=1e-6, reparam_offset=2.0 ** (-18)):
    pedestal = reparam_offset ** 2
    beta_bound = (beta_min + pedestal) ** 0.5
    gamma_bound = reparam_offset
    xf = x.astype(jnp.float32)
    beta = jnp.maximum(beta_param.astype(jnp.float32), beta_bound) ** 2 - pedestal
    gamma = jnp.maximum(gamma_param.astype(jnp.float32), gamma_bound) ** 2 - pedestal
    B, C, H, W = x.shape
    norm = jnp.einsum('oi,bihw->bohw', gamma, xf * xf) + beta.reshape(1, C, 1, 1)
    norm = jnp.sqrt(norm)
    out = xf * norm if inverse else xf / norm
    return out


# ----------------------------------- test -------------------------------------
if __name__ == "__main__":
    reparam_offset = 2.0 ** (-18)
    pedestal = reparam_offset ** 2
    gamma_init = 0.1

    key = jax.random.PRNGKey(0)
    k_x, k_g, k_x2 = jax.random.split(key, 3)

    B, C, H, W = 2, 32, 16, 16
    x = jax.random.normal(k_x, (B, C, H, W), jnp.float32)

    # Module's build(): beta = sqrt(1 + pedestal), gamma = sqrt(g_init*I + pedestal);
    # add small positive noise to gamma so channel mixing is exercised.
    beta_param = jnp.sqrt(jnp.ones((C,), jnp.float32) + pedestal)
    gamma_param = jnp.sqrt(gamma_init * jnp.eye(C, dtype=jnp.float32) + pedestal)
    gamma_param = gamma_param + 0.05 * jnp.abs(
        jax.random.normal(k_g, (C, C), jnp.float32))

    # forward (GDN)
    out = jax.block_until_ready(gdn_forward(x, beta_param, gamma_param))
    ref = _ref_gdn(x, beta_param, gamma_param)
    assert out.shape == x.shape and out.dtype == x.dtype
    assert jnp.allclose(out, ref, rtol=1e-4, atol=1e-4), (
        f"GDN max err {jnp.max(jnp.abs(out - ref))}")

    # inverse path (IGDN)
    out_i = jax.block_until_ready(
        gdn_forward(x, beta_param, gamma_param, inverse=True))
    ref_i = _ref_gdn(x, beta_param, gamma_param, inverse=True)
    assert jnp.allclose(out_i, ref_i, rtol=1e-4, atol=1e-4), (
        f"IGDN max err {jnp.max(jnp.abs(out_i - ref_i))}")

    # non-128-multiple spatial extent (exercises the pad-to-128 path, B=1)
    x2 = jax.random.normal(k_x2, (1, C, 10, 10), jnp.float32)
    out2 = jax.block_until_ready(gdn_forward(x2, beta_param, gamma_param))
    ref2 = _ref_gdn(x2, beta_param, gamma_param)
    assert jnp.allclose(out2, ref2, rtol=1e-4, atol=1e-4), (
        f"GDN pad-path max err {jnp.max(jnp.abs(out2 - ref2))}")

    # native-dtype I/O path (bf16 in -> bf16 out, f32 compute inside kernel)
    x_bf16 = x.astype(jnp.bfloat16)
    out_bf16 = jax.block_until_ready(gdn_forward(x_bf16, beta_param, gamma_param))
    assert out_bf16.dtype == jnp.bfloat16
    ref_bf16 = _ref_gdn(x_bf16, beta_param, gamma_param)
    assert jnp.allclose(out_bf16.astype(jnp.float32), ref_bf16,
                        rtol=2e-2, atol=2e-2), (
        f"GDN bf16 max err "
        f"{jnp.max(jnp.abs(out_bf16.astype(jnp.float32) - ref_bf16))}")

    print("KERNEL_OK")
</pallas_src>

<mosaic_0001>
module attributes {stable_mosaic.version = 11 : i64} {
  func.func @_gdn_kernel(%arg0: i32, %arg1: i32, %arg2: memref<1x32x256xf32, #tpu.memory_space<vmem>>, %arg3: memref<32x32xf32, #tpu.memory_space<vmem>>, %arg4: memref<32x1xf32, #tpu.memory_space<vmem>>, %arg5: memref<1x32x256xf32, #tpu.memory_space<vmem>>) attributes {dimension_semantics = [#tpu.dimension_semantics<parallel>, #tpu.dimension_semantics<parallel>], iteration_bounds = array<i64: 2, 1>, scalar_prefetch = 0 : i64, scratch_operands = 0 : i64, tpu.core_type = #tpu.core_type<tc>, window_params = [{transform_indices = @transform_0, window_bounds = array<i64: 1, 32, 256>}, {pipeline_mode = #tpu.pipeline_mode<synchronous>, transform_indices = @transform_1, window_bounds = array<i64: 32, 32>}, {pipeline_mode = #tpu.pipeline_mode<synchronous>, transform_indices = @transform_2, window_bounds = array<i64: 32, 1>}, {transform_indices = @transform_3, window_bounds = array<i64: 1, 32, 256>}]} {
    %c0 = arith.constant 0 : index
    %c0_0 = arith.constant 0 : index
    %c0_1 = arith.constant 0 : index
    %0 = vector.load %arg2[%c0, %c0_0, %c0_1] : memref<1x32x256xf32, #tpu.memory_space<vmem>>, vector<1x32x256xf32>
    %1 = vector.shape_cast %0 : vector<1x32x256xf32> to vector<32x256xf32>
    %2 = arith.mulf %1, %1 : vector<32x256xf32>
    %c0_2 = arith.constant 0 : index
    %c0_3 = arith.constant 0 : index
    %3 = vector.load %arg3[%c0_2, %c0_3] : memref<32x32xf32, #tpu.memory_space<vmem>>, vector<32x32xf32>
    %cst = arith.constant dense<0.000000e+00> : vector<32x256xf32>
    %4 = tpu.matmul %3, %2, %cst {dimension_numbers = #tpu.dot_dimension_numbers<[1], [0], [0], [1], [0, 0, 1, 1], [], []>} : vector<32x32xf32>, vector<32x256xf32>, vector<32x256xf32> -> vector<32x256xf32>
    %c0_4 = arith.constant 0 : index
    %c0_5 = arith.constant 0 : index
    %5 = vector.load %arg4[%c0_4, %c0_5] : memref<32x1xf32, #tpu.memory_space<vmem>>, vector<32x1xf32>
    %6 = vector.broadcast %5 : vector<32x1xf32> to vector<32x256xf32>
    %7 = arith.addf %4, %6 : vector<32x256xf32>
    %8 = math.rsqrt %7 : vector<32x256xf32>
    %9 = arith.mulf %1, %8 : vector<32x256xf32>
    %c0_6 = arith.constant 0 : index
    %c0_7 = arith.constant 0 : index
    %c0_8 = arith.constant 0 : index
    %10 = vector.load %arg5[%c0_6, %c0_7, %c0_8] : memref<1x32x256xf32, #tpu.memory_space<vmem>>, vector<1x32x256xf32>
    %11 = vector.shape_cast %10 : vector<1x32x256xf32> to vector<32x256xf32>
    %12 = vector.shape_cast %9 : vector<32x256xf32> to vector<1x32x256xf32>
    tpu.vector_store %arg5[%c0_6, %c0_7, %c0_8], %12 {strides = array<i32>} : memref<1x32x256xf32, #tpu.memory_space<vmem>>, vector<1x32x256xf32>,
    return
  }
  func.func @transform_0(%arg0: i32, %arg1: i32) -> (i32, i32, i32) {
    %c0_i32 = arith.constant 0 : i32
    %c0_i32_0 = arith.constant 0 : i32
    return %arg0, %c0_i32, %arg1 : i32, i32, i32
  }
  func.func @transform_1(%arg0: i32, %arg1: i32) -> (i32, i32) {
    %c0_i32 = arith.constant 0 : i32
    %c0_i32_0 = arith.constant 0 : i32
    %c0_i32_1 = arith.constant 0 : i32
    return %c0_i32, %c0_i32_0 : i32, i32
  }
  func.func @transform_2(%arg0: i32, %arg1: i32) -> (i32, i32) {
    %c0_i32 = arith.constant 0 : i32
    %c0_i32_0 = arith.constant 0 : i32
    %c0_i32_1 = arith.constant 0 : i32
    return %c0_i32, %c0_i32_0 : i32, i32
  }
  func.func @transform_3(%arg0: i32, %arg1: i32) -> (i32, i32, i32) {
    %c0_i32 = arith.constant 0 : i32
    %c0_i32_0 = arith.constant 0 : i32
    return %arg0, %c0_i32, %arg1 : i32, i32, i32
  }
}

</mosaic_0001>

<llo_original>
// kernel: tpu_custom_call.1
$region0: #{tpu_custom_call.1}
  #allocation0 [shape = 'u32[]', space=smem, size = 0x4, offset = 0x4, fixed_abs, tag = 'smem constant byte address 0x4 - core index']
  #allocation1 [shape = 'u32[72,128]{1,0:T(1,128)}', space=vmem, size = 0x9000, scoped, tag = 'internal scratch']
  %s0 = inlined_call_operand.hbm [shape: f32[2,32,256], index: 0, kind: input, shape index: {}]
  %s1 = inlined_call_operand.vmem [shape: f32[32,32], index: 1, kind: input, shape index: {}]
  %s2 = inlined_call_operand.vmem [shape: f32[32,1], index: 2, kind: input, shape index: {}]
  %s3 = inlined_call_operand.hbm [shape: f32[2,32,256], index: 3, kind: output, shape index: {}]
  %s4 = sld [smem:[#allocation0]]
  $region49: #{tpu_custom_call.1} parent=0
    _
  %s6 = ssub.s32 1, %s4
  %s7 = scalar_select 0, %s6, %s4
  $region1: #{tpu_custom_call.1} parent=0
    #allocation2 [shape = 'u8[65536]{0}', space=vmem, size = 0x10000, scoped, tag = 'input window, operand 0']
    #allocation3 [shape = 's32[2]{0}', space=sflag, size = 0x8, scoped, tag = 'scoped memory for tpu_custom_call.1']
    #allocation4 [shape = 's32[2]{0}', space=sflag, size = 0x8, scoped, tag = 'scoped memory for tpu_custom_call.1']
    #allocation5 [shape = 'u8[65536]{0}', space=vmem, size = 0x10000, scoped, tag = 'output window, operand 0']
    %8 = vsyncpa [#allocation3], 0
    %s9 = scalar_lea.sflag [#allocation3], 1
    %10 = vsyncpa %s9, 0
    %11 = vsyncpa [#allocation4], 0
    %s12 = scalar_lea.sflag [#allocation4], 1
    %13 = vsyncpa %s12, 0
    loop: start=0, step=1, limit=4
    $region2: #{tpu_custom_call.1} parent=1 // loop_pre_header
      _
    $region3: #{tpu_custom_call.1} parent=1 // loop_header
      %s15 = sphi 0, %s19
      %p16 = scmp.ge.s32.totalorder %s15, 4
      %s22 = sphi 0, %s34
      %s23 = sphi 0, %s30
      %s24 = sphi 0, %s22
      %s25 = sphi 0, %s23
      %s26 = sphi 0, %s24
      %s27 = sphi 0, %s25
      %s39 = sphi 0, %s41
      %s42 = sphi 0, %s39
      %s43 = sphi 0, %s42
      %s59 = sphi 0, %s43
      %s63 = sphi 0, %s63
      %s65 = sphi 0, %s63
      %s66 = sphi 0, %s65
      %s80 = sphi 0, %s66
      %s84 = sphi 0, %s84
      %s86 = sphi 0, %s84
      %s87 = sphi 0, %s86
      %s101 = sphi 0, %s87
      %s109 = sphi 0, %s111
      %s112 = sphi 0, %s109
      %s113 = sphi 0, %s112
      %s129 = sphi 0, %s113
    $region4: #{tpu_custom_call.1} parent=1 // loop_header_branch
      %18 = sbr.rel (%p16) target = $region8
    $region5: #{tpu_custom_call.1} parent=1 // loop_body
      %s20 = ssub.s32 %s15, 1
      %s21 = ssub.s32 %s15, 2
      %s28 = sadd.s32 1, %s23
      %p29 = scmp.ge.s32.totalorder %s28, 1
      %s30 = scalar_select %p29, 0, %s28
      %s31 = sadd.s32 1, %s22
      %s32 = scalar_select %p29, %s31, %s22
      %p33 = scmp.ge.s32.totalorder %s32, 2
      %s34 = scalar_select %p33, 0, %s32
      %s35 = ssub.s32 %s22, %s34
      %s36 = ssub.s32 %s23, %s30
      %s37 = sor.u32 %s35, %s36
      %p38 = scmp.eq.s32.totalorder %s37, 0
      %s40 = sadd.s32 %s39, 1
      %s41 = scalar_select %p38, %s39, %s40
      %p44 = pneg %p38
      %p45 = scmp.eq.s32.totalorder %s15, 1
      %p46 = por %p44, %p45
      %p47 = scmp.ne.s32.totalorder %s39, %s42
      %p48 = scmp.eq.s32.totalorder %s15, 0
      %p49 = por %p47, %p48
      %p50 = scmp.ne.s32.totalorder %s39, %s42
      %p51 = scmp.eq.s32.totalorder %s20, 1
      %p52 = por %p50, %p51
      %p53 = scmp.ne.s32.totalorder %s42, %s43
      %p54 = scmp.eq.s32.totalorder %s20, 0
      %p55 = por %p53, %p54
      %p56 = scmp.ne.s32.totalorder %s42, %s43
      %p57 = scmp.eq.s32.totalorder %s21, 1
      %p58 = por %p56, %p57
      %p60 = scmp.ne.s32.totalorder %s43, %s59
      %p61 = scmp.eq.s32.totalorder %s21, 0
      %p62 = por %p60, %p61
      %s64 = sadd.s32 %s63, 1
      %p67 = scmp.eq.s32.totalorder %s15, 1
      %p68 = scmp.ne.s32.totalorder %s63, %s65
      %p69 = scmp.eq.s32.totalorder %s15, 0
      %p70 = por %p68, %p69
      %p71 = scmp.ne.s32.totalorder %s63, %s65
      %p72 = scmp.eq.s32.totalorder %s20, 1
      %p73 = por %p71, %p72
      %p74 = scmp.ne.s32.totalorder %s65, %s66
      %p75 = scmp.eq.s32.totalorder %s20, 0
      %p76 = por %p74, %p75
      %p77 = scmp.ne.s32.totalorder %s65, %s66
      %p78 = scmp.eq.s32.totalorder %s21, 1
      %p79 = por %p77, %p78
      %p81 = scmp.ne.s32.totalorder %s66, %s80
      %p82 = scmp.eq.s32.totalorder %s21, 0
      %p83 = por %p81, %p82
      %s85 = sadd.s32 %s84, 1
      %p88 = scmp.eq.s32.totalorder %s15, 1
      %p89 = scmp.ne.s32.totalorder %s84, %s86
      %p90 = scmp.eq.s32.totalorder %s15, 0
      %p91 = por %p89, %p90
      %p92 = scmp.ne.s32.totalorder %s84, %s86
      %p93 = scmp.eq.s32.totalorder %s20, 1
      %p94 = por %p92, %p93
      %p95 = scmp.ne.s32.totalorder %s86, %s87
      %p96 = scmp.eq.s32.totalorder %s20, 0
      %p97 = por %p95, %p96
      %p98 = scmp.ne.s32.totalorder %s86, %s87
      %p99 = scmp.eq.s32.totalorder %s21, 1
      %p100 = por %p98, %p99
      %p102 = scmp.ne.s32.totalorder %s87, %s101
      %p103 = scmp.eq.s32.totalorder %s21, 0
      %p104 = por %p102, %p103
      %s105 = ssub.s32 %s22, %s34
      %s106 = ssub.s32 %s23, %s30
      %s107 = sor.u32 %s105, %s106
      %p108 = scmp.eq.s32.totalorder %s107, 0
      %s110 = sadd.s32 %s109, 1
      %s111 = scalar_select %p108, %s109, %s110
      %p114 = pneg %p108
      %p115 = scmp.eq.s32.totalorder %s15, 1
      %p116 = por %p114, %p115
      %p117 = scmp.ne.s32.totalorder %s109, %s112
      %p118 = scmp.eq.s32.totalorder %s15, 0
      %p119 = por %p117, %p118
      %p120 = scmp.ne.s32.totalorder %s109, %s112
      %p121 = scmp.eq.s32.totalorder %s20, 1
      %p122 = por %p120, %p121
      %p123 = scmp.ne.s32.totalorder %s112, %s113
      %p124 = scmp.eq.s32.totalorder %s20, 0
      %p125 = por %p123, %p124
      %p126 = scmp.ne.s32.totalorder %s112, %s113
      %p127 = scmp.eq.s32.totalorder %s21, 1
      %p128 = por %p126, %p127
      %p130 = scmp.ne.s32.totalorder %s113, %s129
      %p131 = scmp.eq.s32.totalorder %s21, 0
      %p132 = por %p130, %p131
      %p133 = scmp.le.s32.totalorder 1, %s15
      %p134 = scmp.lt.s32.totalorder %s15, 3
      %p135 = pnand %p133, %p134
      %p136 = pneg %p135
      // Predicated region
      $region9: #{tpu_custom_call.1} parent=5 // pred_check
        _
      $region10: #{tpu_custom_call.1} parent=5 // pred_check_branch
        %138 = sbr.rel (%p135) target = $region12
      $region11: #{tpu_custom_call.1} parent=5 // pred_region
        %s139 = ssub.s32 %s15, 1
        // Predicated region
        $region13: #{tpu_custom_call.1} parent=11 // pred_check
          %p140 = pneg %p76
        $region14: #{tpu_custom_call.1} parent=11 // pred_check_branch
          %142 = sbr.rel (%p140) target = $region16
        $region15: #{tpu_custom_call.1} parent=11 // pred_region
          _
        $region16: #{tpu_custom_call.1} parent=11 // pred_fallthru
          _
        // Predicated region
        $region17: #{tpu_custom_call.1} parent=11 // pred_check
          %p143 = pneg %p97
        $region18: #{tpu_custom_call.1} parent=11 // pred_check_branch
          %145 = sbr.rel (%p143) target = $region20
        $region19: #{tpu_custom_call.1} parent=11 // pred_region
          _
        $region20: #{tpu_custom_call.1} parent=11 // pred_fallthru
          _
      $region12: #{tpu_custom_call.1} parent=5 // pred_fallthru
        _
      %p146 = scmp.lt.s32.totalorder %s15, 2
      // Predicated region
      $region21: #{tpu_custom_call.1} parent=5 // pred_check
        %p147 = pneg %p146
      $region22: #{tpu_custom_call.1} parent=5 // pred_check_branch
        %149 = sbr.rel (%p147) target = $region24
      $region23: #{tpu_custom_call.1} parent=5 // pred_region
        // Predicated region
        $region25: #{tpu_custom_call.1} parent=23 // pred_check
          %p150 = pneg %p49
        $region26: #{tpu_custom_call.1} parent=23 // pred_check_branch
          %152 = sbr.rel (%p150) target = $region28
        $region27: #{tpu_custom_call.1} parent=23 // pred_region
          %s153 = sand.u32 %s39, 1
          %s154 = scalar_lea.sflag [#allocation3], %s153
          %s155 = sand.u32 %s39, 1
          %s156 = smul.addr %s155, 64
          %s157 = scalar_lea.vmem [#allocation2], %s156
          %s158 = smul.u32 2, %s23
          %160 = vsyncadd %s154, 0
          %s161 = smul.addr %s22, 8
          %s162 = sadd.s32 %s158, %s161
          %s163 = smul.addr %s162, 8
          %s164 = scalar_lea.hbm %s0, %s163
          %s165 = sshll.u32 %s164, 4
          %s166 = int_to_ptr.hbm [resolvable:$true] %s165
          %s167 = sshll.u32 %s157, 4
          %s168 = int_to_ptr.vmem [resolvable:$true] %s167
          %173 = dma.hbm_to_vmem [thread:$0]  %s166, 1024, %s168, %s154, 256, 256, 16
        $region28: #{tpu_custom_call.1} parent=23 // pred_fallthru
          _
      $region24: #{tpu_custom_call.1} parent=5 // pred_fallthru
        _
      %p174 = scmp.le.s32.totalorder 1, %s15
      %p175 = scmp.lt.s32.totalorder %s15, 3
      %p176 = pnand %p174, %p175
      %p177 = pneg %p176
      // Predicated region
      $region29: #{tpu_custom_call.1} parent=5 // pred_check
        _
      $region30: #{tpu_custom_call.1} parent=5 // pred_check_branch
        %179 = sbr.rel (%p176) target = $region32
      $region31: #{tpu_custom_call.1} parent=5 // pred_region
        %s180 = ssub.s32 %s15, 1
        %s181 = sand.u32 %s42, 1
        %s182 = scalar_lea.sflag [#allocation3], %s181
        %s183 = sand.u32 %s42, 1
        %s184 = smul.addr %s183, 64
        %s185 = scalar_lea.vmem [#allocation2], %s184
        // Predicated region
        $region33: #{tpu_custom_call.1} parent=31 // pred_check
          %p186 = pneg %p55
        $region34: #{tpu_custom_call.1} parent=31 // pred_check_branch
          %188 = sbr.rel (%p186) target = $region36
        $region35: #{tpu_custom_call.1} parent=31 // pred_region
          %190 = dma.done %s182, 1024
        $region36: #{tpu_custom_call.1} parent=31 // pred_fallthru
          _
        %s191 = sand.u32 %s42, 1
        %s192 = scalar_lea.sflag [#allocation3], %s191
        %s193 = sand.u32 %s42, 1
        %s194 = smul.addr %s193, 64
        %s195 = scalar_lea.vmem [#allocation2], %s194
        %p196 = pneg %p55
        %p197 = pneg %p52
        %p198 = pneg %p76
        %p199 = pneg %p73
        %p200 = pneg %p97
        %p201 = pneg %p94
        %p202 = pneg %p125
        %p203 = pneg %p122
        %s204 = sand.u32 %s112, 1
        %s205 = scalar_lea.sflag [#allocation4], %s204
        %s206 = sand.u32 %s112, 1
        %s207 = smul.addr %s206, 64
        %s208 = scalar_lea.vmem [#allocation5], %s207
        %s209 = smul.u32 2, %s25
        %s210 = smul.u32 2, %s25
        %v211 = vld [vmem:[%s185] sm:$0xff]
        %v212 = vld [vmem:[%s185 + $0x8] sm:$0xff]
        %v213 = vld [vmem:[%s185 + $0x10] sm:$0xff]
        %v214 = vld [vmem:[%s185 + $0x18] sm:$0xff]
        %v215 = vld [vmem:[%s185 + $0x20] sm:$0xff]
        %v216 = vld [vmem:[%s185 + $0x28] sm:$0xff]
        %v217 = vld [vmem:[%s185 + $0x30] sm:$0xff]
        %v218 = vld [vmem:[%s185 + $0x38] sm:$0xff]
        %v219 = vmul.f32 %v211, %v211
        %v220 = vmul.f32 %v212, %v212
        %v221 = vmul.f32 %v213, %v213
        %v222 = vmul.f32 %v214, %v214
        %v223 = vmul.f32 %v215, %v215
        %v224 = vmul.f32 %v216, %v216
        %v225 = vmul.f32 %v217, %v217
        %v226 = vmul.f32 %v218, %v218
        %v227 = vld [vmem:[%s1] sm:$0xff]
        %v228 = vld [vmem:[%s1 + $0x8] sm:$0xff]
        %v229 = vld [vmem:[%s1 + $0x10] sm:$0xff]
        %v230 = vld [vmem:[%s1 + $0x18] sm:$0xff]
        %v231 = vld [vmem:[%s2] sm:$0xff]
        %v232 = vld [vmem:[%s2 + $0x8] sm:$0xff]
        %v233 = vld [vmem:[%s2 + $0x10] sm:$0xff]
        %v234 = vld [vmem:[%s2 + $0x18] sm:$0xff]
        %236 = vset.pattern.permute.xlu0 0
        %237 = vperm.xlu0 %236, %v231
        %v238 = vpop.permute.xlu0 %237
        %241 = vset.pattern.permute.xlu0 0
        %242 = vperm.xlu0 %241, %v232
        %v243 = vpop.permute.xlu0 %242
        %246 = vset.pattern.permute.xlu0 0
        %247 = vperm.xlu0 %246, %v233
        %v248 = vpop.permute.xlu0 %247
        %251 = vset.pattern.permute.xlu0 0
        %252 = vperm.xlu0 %251, %v234
        %v253 = vpop.permute.xlu0 %252
        %vm255 = vcmask 261120
        %v257 = vsel %vm255, %v227, 0
        %v260 = vsel %vm255, %v228, 0
        %v263 = vsel %vm255, %v229, 0
        %v266 = vsel %vm255, %v230, 0
        %268 = vmatpush.msra.mxu0 0.0
        %269 = vmatpush.msra.mxu0 0.0
        %270 = vmatpush.msra.mxu0 0.0
        %271 = vmatpush.msra.mxu0 0.0
        %272 = vmatpush.msra.mxu0 0.0
        %273 = vmatpush.msra.mxu0 0.0
        %274 = vmatpush.msra.mxu0 0.0
        %275 = vmatpush.msra.mxu0 0.0
        %276 = vmatpush.msra.mxu0 0.0
        %277 = vmatpush.msra.mxu0 0.0
        %278 = vmatpush.msra.mxu0 0.0
        %279 = vmatpush.msra.mxu0 0.0
        %280 = vmatpush.msra.mxu0 %v225
        %281 = vmatpush.msra.mxu0 %v223
        %282 = vmatpush.msra.mxu0 %v221
        %283 = vmatpush.msra.mxu0 %v219
        %284 = vmatmul.f32.gmra.mxu0 %v257
        %v285 = vpop.f32.mrf.mxu0
        %v286 = vadd.f32 %v238, %v285
        %287 = vmatmul.f32.gmra.mxu0 %v260
        %v288 = vpop.f32.mrf.mxu0
        %v289 = vadd.f32 %v243, %v288
        %290 = vmatmul.f32.gmra.mxu0 %v263
        %v291 = vpop.f32.mrf.mxu0
        %v292 = vadd.f32 %v248, %v291
        %293 = vmatmul.f32.gmra.mxu0 %v266
        %v294 = vpop.f32.mrf.mxu0
        %v295 = vadd.f32 %v253, %v294
        %296 = vdwg.mxu0
        %297 = vmatpush.msra.mxu0 0.0
        %298 = vmatpush.msra.mxu0 0.0
        %299 = vmatpush.msra.mxu0 0.0
        %300 = vmatpush.msra.mxu0 0.0
        %301 = vmatpush.msra.mxu0 0.0
        %302 = vmatpush.msra.mxu0 0.0
        %303 = vmatpush.msra.mxu0 0.0
        %304 = vmatpush.msra.mxu0 0.0
        %305 = vmatpush.msra.mxu0 0.0
        %306 = vmatpush.msra.mxu0 0.0
        %307 = vmatpush.msra.mxu0 0.0
        %308 = vmatpush.msra.mxu0 0.0
        %309 = vmatpush.msra.mxu0 %v226
        %310 = vmatpush.msra.mxu0 %v224
        %311 = vmatpush.msra.mxu0 %v222
        %312 = vmatpush.msra.mxu0 %v220
        %313 = vmatmul.f32.gmra.mxu0 %v257
        %v314 = vpop.f32.mrf.mxu0
        %v315 = vadd.f32 %v238, %v314
        %316 = vmatmul.f32.gmra.mxu0 %v260
        %v317 = vpop.f32.mrf.mxu0
        %v318 = vadd.f32 %v243, %v317
        %319 = vmatmul.f32.gmra.mxu0 %v263
        %v320 = vpop.f32.mrf.mxu0
        %v321 = vadd.f32 %v248, %v320
        %322 = vmatmul.f32.gmra.mxu0 %v266
        %v323 = vpop.f32.mrf.mxu0
        %v324 = vadd.f32 %v253, %v323
        %325 = vdwg.mxu0
        %v326 = vrsqrt.pop %v286
        %v327 = vmul.f32 %v326, %v286
        %v328 = vmul.f32 %v327, %v326
        %v329 = vmul.f32 0.5, %v328
        %v330 = vsub.f32 1.5, %v329
        %v331 = vmul.f32 %v326, %v330
        %vm332 = vweird.f32 %v286
        %vm333 = vweird.f32 %v326
        %vm334 = vmor %vm332, %vm333
        %v335 = vsel %vm334, %v326, %v331
        %v336 = vrsqrt.pop %v315
        %v337 = vmul.f32 %v336, %v315
        %v338 = vmul.f32 %v337, %v336
        %v339 = vmul.f32 0.5, %v338
        %v340 = vsub.f32 1.5, %v339
        %v341 = vmul.f32 %v336, %v340
        %vm342 = vweird.f32 %v315
        %vm343 = vweird.f32 %v336
        %vm344 = vmor %vm342, %vm343
        %v345 = vsel %vm344, %v336, %v341
        %v346 = vrsqrt.pop %v289
        %v347 = vmul.f32 %v346, %v289
        %v348 = vmul.f32 %v347, %v346
        %v349 = vmul.f32 0.5, %v348
        %v350 = vsub.f32 1.5, %v349
        %v351 = vmul.f32 %v346, %v350
        %vm352 = vweird.f32 %v289
        %vm353 = vweird.f32 %v346
        %vm354 = vmor %vm352, %vm353
        %v355 = vsel %vm354, %v346, %v351
        %v356 = vrsqrt.pop %v318
        %v357 = vmul.f32 %v356, %v318
        %v358 = vmul.f32 %v357, %v356
        %v359 = vmul.f32 0.5, %v358
        %v360 = vsub.f32 1.5, %v359
        %v361 = vmul.f32 %v356, %v360
        %vm362 = vweird.f32 %v318
        %vm363 = vweird.f32 %v356
        %vm364 = vmor %vm362, %vm363
        %v365 = vsel %vm364, %v356, %v361
        %v366 = vrsqrt.pop %v292
        %v367 = vmul.f32 %v366, %v292
        %v368 = vmul.f32 %v367, %v366
        %v369 = vmul.f32 0.5, %v368
        %v370 = vsub.f32 1.5, %v369
        %v371 = vmul.f32 %v366, %v370
        %vm372 = vweird.f32 %v292
        %vm373 = vweird.f32 %v366
        %vm374 = vmor %vm372, %vm373
        %v375 = vsel %vm374, %v366, %v371
        %v376 = vrsqrt.pop %v321
        %v377 = vmul.f32 %v376, %v321
        %v378 = vmul.f32 %v377, %v376
        %v379 = vmul.f32 0.5, %v378
        %v380 = vsub.f32 1.5, %v379
        %v381 = vmul.f32 %v376, %v380
        %vm382 = vweird.f32 %v321
        %vm383 = vweird.f32 %v376
        %vm384 = vmor %vm382, %vm383
        %v385 = vsel %vm384, %v376, %v381
        %v386 = vrsqrt.pop %v295
        %v387 = vmul.f32 %v386, %v295
        %v388 = vmul.f32 %v387, %v386
        %v389 = vmul.f32 0.5, %v388
        %v390 = vsub.f32 1.5, %v389
        %v391 = vmul.f32 %v386, %v390
        %vm392 = vweird.f32 %v295
        %vm393 = vweird.f32 %v386
        %vm394 = vmor %vm392, %vm393
        %v395 = vsel %vm394, %v386, %v391
        %v396 = vrsqrt.pop %v324
        %v397 = vmul.f32 %v396, %v324
        %v398 = vmul.f32 %v397, %v396
        %v399 = vmul.f32 0.5, %v398
        %v400 = vsub.f32 1.5, %v399
        %v401 = vmul.f32 %v396, %v400
        %vm402 = vweird.f32 %v324
        %vm403 = vweird.f32 %v396
        %vm404 = vmor %vm402, %vm403
        %v405 = vsel %vm404, %v396, %v401
        %v406 = vmul.f32 %v211, %v335
        %v407 = vmul.f32 %v212, %v345
        %v408 = vmul.f32 %v213, %v355
        %v409 = vmul.f32 %v214, %v365
        %v410 = vmul.f32 %v215, %v375
        %v411 = vmul.f32 %v216, %v385
        %v412 = vmul.f32 %v217, %v395
        %v413 = vmul.f32 %v218, %v405
        %414 = vst [vmem:[%s208] sm:$0xff] %v406
        %415 = vst [vmem:[%s208 + $0x8] sm:$0xff] %v407
        %416 = vst [vmem:[%s208 + $0x10] sm:$0xff] %v408
        %417 = vst [vmem:[%s208 + $0x18] sm:$0xff] %v409
        %418 = vst [vmem:[%s208 + $0x20] sm:$0xff] %v410
        %419 = vst [vmem:[%s208 + $0x28] sm:$0xff] %v411
        %420 = vst [vmem:[%s208 + $0x30] sm:$0xff] %v412
        %421 = vst [vmem:[%s208 + $0x38] sm:$0xff] %v413
        %s422 = sand.u32 %s112, 1
        %s423 = scalar_lea.sflag [#allocation4], %s422
        %s424 = sand.u32 %s112, 1
        %s425 = smul.addr %s424, 64
        %s426 = scalar_lea.vmem [#allocation5], %s425
        // Predicated region
        $region37: #{tpu_custom_call.1} parent=31 // pred_check
          %p427 = pneg %p122
        $region38: #{tpu_custom_call.1} parent=31 // pred_check_branch
          %429 = sbr.rel (%p427) target = $region40
        $region39: #{tpu_custom_call.1} parent=31 // pred_region
          %s430 = smul.u32 2, %s25
          %432 = vsyncadd %s423, 0
          %s433 = smul.addr %s24, 8
          %s434 = sadd.s32 %s430, %s433
          %s435 = smul.addr %s434, 8
          %s436 = scalar_lea.hbm %s3, %s435
          %s437 = sshll.u32 %s426, 4
          %s438 = int_to_ptr.vmem [resolvable:$true] %s437
          %s439 = sshll.u32 %s436, 4
          %s440 = int_to_ptr.hbm [resolvable:$true] %s439
          %445 = dma.vmem_to_hbm [thread:$0]  %s438, 1024, %s440, %s423, 256, 256, 16
        $region40: #{tpu_custom_call.1} parent=31 // pred_fallthru
          _
      $region32: #{tpu_custom_call.1} parent=5 // pred_fallthru
        _
      %p446 = scmp.le.s32.totalorder 2, %s15
      // Predicated region
      $region41: #{tpu_custom_call.1} parent=5 // pred_check
        %p447 = pneg %p446
      $region42: #{tpu_custom_call.1} parent=5 // pred_check_branch
        %449 = sbr.rel (%p447) target = $region44
      $region43: #{tpu_custom_call.1} parent=5 // pred_region
        %s450 = ssub.s32 %s15, 2
        // Predicated region
        $region45: #{tpu_custom_call.1} parent=43 // pred_check
          %p451 = pneg %p128
        $region46: #{tpu_custom_call.1} parent=43 // pred_check_branch
          %453 = sbr.rel (%p451) target = $region48
        $region47: #{tpu_custom_call.1} parent=43 // pred_region
          %s454 = sand.u32 %s113, 1
          %s455 = scalar_lea.sflag [#allocation4], %s454
          %s456 = sand.u32 %s113, 1
          %s457 = smul.addr %s456, 64
          %s458 = scalar_lea.vmem [#allocation5], %s457
          %460 = dma.done %s455, 1024
        $region48: #{tpu_custom_call.1} parent=43 // pred_fallthru
          _
      $region44: #{tpu_custom_call.1} parent=5 // pred_fallthru
        _
    $region6: #{tpu_custom_call.1} parent=1 // loop_footer
      %s19 = sadd.s32 1, %s15
    $region7: #{tpu_custom_call.1} parent=1 // loop_footer_branch
      %14 = sbr.rel target = $region3
    $region8: #{tpu_custom_call.1} parent=1 // loop_exit
      _
    %461 = vsyncpa [#allocation3], 1
    %s462 = scalar_lea.sflag [#allocation3], 1
    %463 = vsyncpa %s462, 1
    %464 = vsyncpa [#allocation4], 1
    %s465 = scalar_lea.sflag [#allocation4], 1
    %466 = vsyncpa %s465, 1

</llo_original>
